<compile_context>
chip_gen: v7x
topology: tpu7x:2x2x1
jax: 0.10.0
libtpu: 0.0.40
codegen_flags: <defaults>
</compile_context>

<pallas_src>
import functools

import jax
import jax.numpy as jnp
from jax import lax
from jax.experimental import pallas as pl
from jax.experimental.pallas import tpu as pltpu

PAD_IDX = 0


def encoder_relu_kernel(x_ref, w1_ref, b1_ref, w2_ref, b2_ref,
                        wc_ref, bc_ref, wg1_ref, bg1_ref, wg2_ref, bg2_ref,
                        out_ref, *, S, E, H, K, pad, Bt):
    """One grid step == one tile of Bt batch elements (rows are (batch, seq) flattened).

    x_ref  : (Bt*S, E)   bf16 embedded tokens, row r = local_batch*S + s
    w1_ref : (K, E, H)   bf16 conv1 weights, w1[k] == torch_conv1.weight[:, :, k].T
    w2_ref : (K, H, H)   bf16 conv2 weights
    b1/b2  : (1, H)      f32 conv biases
    wc_ref : (S, 1)      f32 cpr_linear weight (torch (1, S) transposed)
    bc_ref : (1, 1)      f32 cpr_linear bias (SMEM scalar)
    wg*    : (H, H) bf16, bg*: (1, H) f32  gen_ctx Linear params ((in, out) layout)
    out_ref: (Bt, H)     f32 context tile (lane-dense 2-D output)
    """
    M = Bt * S
    # Within-batch sequence position of every row; used to zero rows whose shifted
    # source would fall outside [0, S) (this also prevents any cross-batch bleed
    # from the wrap-around roll, including into zero-padded batch rows).
    pos = lax.broadcasted_iota(jnp.int32, (M, 1), 0) % S

    # Load the tile once; shifts/masks run in f32 registers (VPU/XLU), MXU sees bf16.
    x = x_ref[...].astype(jnp.float32)                       # (M, E) f32

    def conv1d_relu(xin, w_ref, b_ref):
        """y[b,s,:] = relu(b + sum_k x[b, s+k-pad, :] @ w[k]) with zero padding."""
        acc = jnp.zeros((M, H), jnp.float32)
        for k in range(K):                                   # K static MXU passes
            off = k - pad
            if off == 0:
                xs = xin
            else:
                # out[r] = xin[r + off] (wrapped), then mask invalid rows to zero.
                xs = pltpu.roll(xin, shift=(-off) % M, axis=0)
                valid = (pos + off >= 0) & (pos + off < S)
                xs = jnp.where(valid, xs, 0.0)
            acc = acc + jnp.dot(xs.astype(jnp.bfloat16), w_ref[k],
                                preferred_element_type=jnp.float32)
        return jnp.maximum(acc + b_ref[...], 0.0)            # (M, H) f32

    h1 = conv1d_relu(x, w1_ref, b1_ref)                      # conv1 + ReLU
    h2 = conv1d_relu(h1, w2_ref, b2_ref)                     # conv2 + ReLU

    # cpr_linear: nn.Linear(seq_len, 1) over the sequence axis, + ReLU.
    ctx = jnp.sum(h2.reshape(Bt, S, H) * wc_ref[...][None, :, :], axis=1)   # (Bt, H)
    ctx = jnp.maximum(ctx + bc_ref[0, 0], 0.0)

    # gen_ctx: Linear -> ReLU -> Dropout(identity) -> Linear.
    # TODO(synk): dropout is a no-op here (eval semantics); training-mode dropout not implemented.
    c = jnp.dot(ctx.astype(jnp.bfloat16), wg1_ref[...],
                preferred_element_type=jnp.float32) + bg1_ref[...]
    c = jnp.maximum(c, 0.0)
    c = jnp.dot(c.astype(jnp.bfloat16), wg2_ref[...],
                preferred_element_type=jnp.float32) + bg2_ref[...]

    out_ref[...] = c                                         # (Bt, H)


def encoder_relu_forward(enc_input, lengths, params, kernel_size, *, block_b=None):
    """enc_input: (B, S) int32 token ids. `lengths` is unused (matches PyTorch)."""
    del lengths
    if kernel_size % 2 != 1:
        # padding=K//2 with even K changes the conv output length in PyTorch.
        raise ValueError("kernel_size must be odd to preserve the sequence length")
    B, S = enc_input.shape
    E = params["embed"].shape[1]
    H = params["b1"].shape[-1]
    K = kernel_size
    pad = K // 2

    # Embedding gather stays in plain JAX; activations enter the kernel in bf16
    # (table cast once so the gathered HBM stream is half-width).
    # TODO(synk): fuse the gather itself into the kernel via scalar-prefetch DMA row-gather.
    emb = params["embed"].astype(jnp.bfloat16)[enc_input]    # (B, S, E) bf16

    # Batch tile per grid step: whole batch for small B (single, full-extent block),
    # otherwise up to 128 rows (multiple of 8 for the (8,128) block rule) while
    # keeping >= 2 grid steps so v7x's two TensorCores both get work.
    if block_b is None:
        block_b = B if B <= 64 else min(128, ((B // 2 + 7) // 8) * 8)
    Bp = ((B + block_b - 1) // block_b) * block_b
    if Bp != B:
        emb = jnp.pad(emb, ((0, Bp - B), (0, 0), (0, 0)))
    # Flatten to the 2-D layout the kernel works in (free reshape in XLA).
    x2d = emb.reshape(Bp * S, E)                              # (Bp*S, E) bf16

    w1 = params["w1"].astype(jnp.bfloat16)                    # (K, E, H)
    w2 = params["w2"].astype(jnp.bfloat16)                    # (K, H, H)
    wg1 = params["wg1"].astype(jnp.bfloat16)
    wg2 = params["wg2"].astype(jnp.bfloat16)

    kern = functools.partial(encoder_relu_kernel,
                             S=S, E=E, H=H, K=K, pad=pad, Bt=block_b)
    const = lambda shape: pl.BlockSpec(shape, lambda b, _s=shape: tuple(0 for _ in _s))

    out = pl.pallas_call(
        kern,
        out_shape=jax.ShapeDtypeStruct((Bp, H), jnp.float32),
        grid=(Bp // block_b,),
        in_specs=[
            pl.BlockSpec((block_b * S, E), lambda b: (b, 0)),   # embedded tokens (2-D)
            const((K, E, H)),                                   # w1
            const((1, H)),                                      # b1
            const((K, H, H)),                                   # w2
            const((1, H)),                                      # b2
            const((S, 1)),                                      # cpr_linear weight
            pl.BlockSpec(memory_space=pltpu.MemorySpace.SMEM),  # cpr_linear bias (scalar)
            const((H, H)),                                      # gen_ctx wg1
            const((1, H)),                                      # gen_ctx bg1
            const((H, H)),                                      # gen_ctx wg2
            const((1, H)),                                      # gen_ctx bg2
        ],
        out_specs=pl.BlockSpec((block_b, H), lambda b: (b, 0)),
        compiler_params=pltpu.CompilerParams(
            dimension_semantics=("parallel",),      # v7x: shard batch tiles over both TCs
            vmem_limit_bytes=32 * 1024 * 1024),     # no scratches -> tiny footprint; safe on v5e/v6e/v7x
    )(x2d, w1, params["b1"], w2, params["b2"],
      params["wc"], params["bc"], wg1, params["bg1"], wg2, params["bg2"])

    return out[:B][None]   # (1, B, H) == context.unsqueeze(0)


def reference_forward(enc_input, params, kernel_size):
    """Pure-JAX f32 reference of the same forward (for the correctness check)."""
    emb = params["embed"][enc_input]
    B, S, E = emb.shape
    H = params["b1"].shape[-1]
    K = kernel_size
    pad = K // 2
    x = jnp.pad(emb, ((0, 0), (pad, pad), (0, 0)))
    h1 = jnp.zeros((B, S, H), jnp.float32)
    for k in range(K):
        h1 = h1 + jnp.einsum("bse,eh->bsh", x[:, k:k + S, :], params["w1"][k])
    h1 = jax.nn.relu(h1 + params["b1"])
    h1p = jnp.pad(h1, ((0, 0), (pad, pad), (0, 0)))
    h2 = jnp.zeros((B, S, H), jnp.float32)
    for k in range(K):
        h2 = h2 + jnp.einsum("bsh,hg->bsg", h1p[:, k:k + S, :], params["w2"][k])
    h2 = jax.nn.relu(h2 + params["b2"])
    # cpr_linear over the seq axis, then ReLU (== F.relu(cpr_linear(...)).squeeze(2))
    ctx = jnp.einsum("bsh,s->bh", h2, params["wc"][:, 0]) + params["bc"][0, 0]
    ctx = jax.nn.relu(ctx)
    c = jax.nn.relu(ctx @ params["wg1"] + params["bg1"])
    c = c @ params["wg2"] + params["bg2"]
    return c[None]  # (1, B, H)


def init_params(key, vocab_size, emb_size, hidden_size, kernel_size, seq_len):
    ks = jax.random.split(key, 11)
    scale = 0.1
    embed = scale * jax.random.normal(ks[0], (vocab_size, emb_size), jnp.float32)
    embed = embed.at[PAD_IDX].set(0.0)  # padding_idx row is zero
    return {
        "embed": embed,
        # conv weights stored as (K, Cin, Cout): w[k] == torch_weight[:, :, k].T
        "w1": scale * jax.random.normal(ks[1], (kernel_size, emb_size, hidden_size), jnp.float32),
        "b1": scale * jax.random.normal(ks[2], (1, hidden_size), jnp.float32),
        "w2": scale * jax.random.normal(ks[3], (kernel_size, hidden_size, hidden_size), jnp.float32),
        "b2": scale * jax.random.normal(ks[4], (1, hidden_size), jnp.float32),
        # cpr_linear: torch weight (1, seq_len) stored transposed as (seq_len, 1); bias (1,1)
        "wc": scale * jax.random.normal(ks[5], (seq_len, 1), jnp.float32),
        "bc": scale * jax.random.normal(ks[6], (1, 1), jnp.float32),
        # gen_ctx linear weights stored (in, out): y = x @ w + b (== x @ torch_w.T + b)
        "wg1": scale * jax.random.normal(ks[7], (hidden_size, hidden_size), jnp.float32),
        "bg1": scale * jax.random.normal(ks[8], (1, hidden_size), jnp.float32),
        "wg2": scale * jax.random.normal(ks[9], (hidden_size, hidden_size), jnp.float32),
        "bg2": scale * jax.random.normal(ks[10], (1, hidden_size), jnp.float32),
    }


if __name__ == "__main__":
    vocab_size, emb_size, hidden_size, kernel_size = 50, 32, 32, 3
    batch, seq_len = 2, 8

    key = jax.random.PRNGKey(0)
    pkey, ikey = jax.random.split(key)
    params = init_params(pkey, vocab_size, emb_size, hidden_size, kernel_size, seq_len)

    enc_input = jax.random.randint(ikey, (batch, seq_len), 0, vocab_size, jnp.int32)
    lengths = jnp.full((batch,), seq_len, jnp.int32)

    ctx = encoder_relu_forward(enc_input, lengths, params, kernel_size)
    ctx = jax.block_until_ready(ctx)

    ref = reference_forward(enc_input, params, kernel_size)
    assert ctx.shape == (1, batch, hidden_size), ctx.shape
    # tolerance accounts for bf16 embeddings / MXU operands (f32 accumulation everywhere)
    assert jnp.allclose(ctx, ref, atol=1e-2, rtol=2e-2), (
        "mismatch vs reference", float(jnp.max(jnp.abs(ctx - ref))))

    print("KERNEL_OK")
</pallas_src>

<mosaic_0001>
module attributes {stable_mosaic.version = 11 : i64} {
  func.func @encoder_relu_kernel(%arg0: i32, %arg1: memref<16x32xbf16, #tpu.memory_space<vmem>>, %arg2: memref<3x32x32xbf16, #tpu.memory_space<vmem>>, %arg3: memref<1x32xf32, #tpu.memory_space<vmem>>, %arg4: memref<3x32x32xbf16, #tpu.memory_space<vmem>>, %arg5: memref<1x32xf32, #tpu.memory_space<vmem>>, %arg6: memref<8x1xf32, #tpu.memory_space<vmem>>, %arg7: memref<1x1xf32, #tpu.memory_space<smem>>, %arg8: memref<32x32xbf16, #tpu.memory_space<vmem>>, %arg9: memref<1x32xf32, #tpu.memory_space<vmem>>, %arg10: memref<32x32xbf16, #tpu.memory_space<vmem>>, %arg11: memref<1x32xf32, #tpu.memory_space<vmem>>, %arg12: memref<2x32xf32, #tpu.memory_space<vmem>>) attributes {dimension_semantics = [#tpu.dimension_semantics<parallel>], iteration_bounds = array<i64: 1>, scalar_prefetch = 0 : i64, scratch_operands = 0 : i64, tpu.core_type = #tpu.core_type<tc>, window_params = [{transform_indices = @transform_0, window_bounds = array<i64: 16, 32>}, {pipeline_mode = #tpu.pipeline_mode<synchronous>, transform_indices = @transform_1, window_bounds = array<i64: 3, 32, 32>}, {pipeline_mode = #tpu.pipeline_mode<synchronous>, transform_indices = @transform_2, window_bounds = array<i64: 1, 32>}, {pipeline_mode = #tpu.pipeline_mode<synchronous>, transform_indices = @transform_3, window_bounds = array<i64: 3, 32, 32>}, {pipeline_mode = #tpu.pipeline_mode<synchronous>, transform_indices = @transform_4, window_bounds = array<i64: 1, 32>}, {pipeline_mode = #tpu.pipeline_mode<synchronous>, transform_indices = @transform_5, window_bounds = array<i64: 8, 1>}, {transform_indices = @transform_6, window_bounds = array<i64: 1, 1>}, {pipeline_mode = #tpu.pipeline_mode<synchronous>, transform_indices = @transform_7, window_bounds = array<i64: 32, 32>}, {pipeline_mode = #tpu.pipeline_mode<synchronous>, transform_indices = @transform_8, window_bounds = array<i64: 1, 32>}, {pipeline_mode = #tpu.pipeline_mode<synchronous>, transform_indices = @transform_9, window_bounds = array<i64: 32, 32>}, {pipeline_mode = #tpu.pipeline_mode<synchronous>, transform_indices = @transform_10, window_bounds = array<i64: 1, 32>}, {transform_indices = @transform_11, window_bounds = array<i64: 2, 32>}]} {
    %0 = tpu.iota {dimensions = array<i32: 0>} : vector<16x1xi32>
    %c8_i32 = arith.constant 8 : i32
    %c0_i32 = arith.constant 0 : i32
    %1 = arith.cmpi eq, %c8_i32, %c0_i32 : i32
    %c1_i32 = arith.constant 1 : i32
    %2 = arith.select %1, %c1_i32, %c8_i32 : i32
    %3 = vector.broadcast %2 : i32 to vector<16x1xi32>
    %4 = arith.remsi %0, %3 : vector<16x1xi32>
    %c0_i32_0 = arith.constant 0 : i32
    %5 = vector.broadcast %c0_i32_0 : i32 to vector<16x1xi32>
    %6 = arith.cmpi ne, %4, %5 : vector<16x1xi32>
    %c0_i32_1 = arith.constant 0 : i32
    %7 = vector.broadcast %c0_i32_1 : i32 to vector<16x1xi32>
    %8 = arith.cmpi slt, %4, %7 : vector<16x1xi32>
    %c0_i32_2 = arith.constant 0 : i32
    %9 = arith.cmpi slt, %2, %c0_i32_2 : i32
    %10 = vector.broadcast %9 : i1 to vector<16x1xi1>
    %11 = vector.broadcast %10 : vector<16x1xi1> to vector<16x1xi1>
    %12 = arith.xori %8, %11 : vector<16x1xi1>
    %13 = arith.andi %12, %6 : vector<16x1xi1>
    %14 = vector.broadcast %2 : i32 to vector<16x1xi32>
    %15 = arith.addi %4, %14 : vector<16x1xi32>
    %16 = arith.select %13, %15, %4 : vector<16x1xi1>, vector<16x1xi32>
    %c0 = arith.constant 0 : index
    %c0_3 = arith.constant 0 : index
    %17 = vector.load %arg1[%c0, %c0_3] : memref<16x32xbf16, #tpu.memory_space<vmem>>, vector<16x32xbf16>
    %18 = arith.extf %17 : vector<16x32xbf16> to vector<16x32xf32>
    %cst = arith.constant 0.000000e+00 : f32
    %19 = vector.broadcast %cst : f32 to vector<16x32xf32>
    %c1_i32_4 = arith.constant 1 : i32
    %20 = tpu.dynamic_rotate %18 by %c1_i32_4 dim 0 : vector<16x32xf32>, i32 -> vector<16x32xf32>
    %c-1_i32 = arith.constant -1 : i32
    %21 = vector.broadcast %c-1_i32 : i32 to vector<16x1xi32>
    %22 = arith.addi %16, %21 : vector<16x1xi32>
    %c0_i32_5 = arith.constant 0 : i32
    %23 = vector.broadcast %c0_i32_5 : i32 to vector<16x1xi32>
    %24 = arith.cmpi sge, %22, %23 : vector<16x1xi32>
    %c-1_i32_6 = arith.constant -1 : i32
    %25 = vector.broadcast %c-1_i32_6 : i32 to vector<16x1xi32>
    %26 = arith.addi %16, %25 : vector<16x1xi32>
    %c8_i32_7 = arith.constant 8 : i32
    %27 = vector.broadcast %c8_i32_7 : i32 to vector<16x1xi32>
    %28 = arith.cmpi slt, %26, %27 : vector<16x1xi32>
    %29 = arith.andi %24, %28 : vector<16x1xi1>
    %cst_8 = arith.constant 0.000000e+00 : f32
    %30 = vector.shape_cast %29 : vector<16x1xi1> to vector<16x1xi1>
    %31 = vector.broadcast %30 : vector<16x1xi1> to vector<16x32xi1>
    %32 = vector.broadcast %cst_8 : f32 to vector<16x32xf32>
    %33 = arith.select %31, %20, %32 : vector<16x32xi1>, vector<16x32xf32>
    %34 = arith.truncf %33 : vector<16x32xf32> to vector<16x32xbf16>
    %c0_9 = arith.constant 0 : index
    %c0_10 = arith.constant 0 : index
    %c0_11 = arith.constant 0 : index
    %35 = vector.load %arg2[%c0_9, %c0_10, %c0_11] : memref<3x32x32xbf16, #tpu.memory_space<vmem>>, vector<1x32x32xbf16>
    %36 = vector.shape_cast %35 : vector<1x32x32xbf16> to vector<32x32xbf16>
    %cst_12 = arith.constant dense<0.000000e+00> : vector<16x32xf32>
    %37 = tpu.matmul %34, %36, %cst_12 {dimension_numbers = #tpu.dot_dimension_numbers<[1], [0], [0], [1], [0, 0, 1, 1], [], []>} : vector<16x32xbf16>, vector<32x32xbf16>, vector<16x32xf32> -> vector<16x32xf32>
    %38 = arith.addf %19, %37 : vector<16x32xf32>
    %39 = arith.truncf %18 : vector<16x32xf32> to vector<16x32xbf16>
    %c1 = arith.constant 1 : index
    %c0_13 = arith.constant 0 : index
    %c0_14 = arith.constant 0 : index
    %40 = vector.load %arg2[%c1, %c0_13, %c0_14] : memref<3x32x32xbf16, #tpu.memory_space<vmem>>, vector<1x32x32xbf16>
    %41 = vector.shape_cast %40 : vector<1x32x32xbf16> to vector<32x32xbf16>
    %cst_15 = arith.constant dense<0.000000e+00> : vector<16x32xf32>
    %42 = tpu.matmul %39, %41, %cst_15 {dimension_numbers = #tpu.dot_dimension_numbers<[1], [0], [0], [1], [0, 0, 1, 1], [], []>} : vector<16x32xbf16>, vector<32x32xbf16>, vector<16x32xf32> -> vector<16x32xf32>
    %43 = arith.addf %38, %42 : vector<16x32xf32>
    %c15_i32 = arith.constant 15 : i32
    %44 = tpu.dynamic_rotate %18 by %c15_i32 dim 0 : vector<16x32xf32>, i32 -> vector<16x32xf32>
    %c1_i32_16 = arith.constant 1 : i32
    %45 = vector.broadcast %c1_i32_16 : i32 to vector<16x1xi32>
    %46 = arith.addi %16, %45 : vector<16x1xi32>
    %c0_i32_17 = arith.constant 0 : i32
    %47 = vector.broadcast %c0_i32_17 : i32 to vector<16x1xi32>
    %48 = arith.cmpi sge, %46, %47 : vector<16x1xi32>
    %c1_i32_18 = arith.constant 1 : i32
    %49 = vector.broadcast %c1_i32_18 : i32 to vector<16x1xi32>
    %50 = arith.addi %16, %49 : vector<16x1xi32>
    %c8_i32_19 = arith.constant 8 : i32
    %51 = vector.broadcast %c8_i32_19 : i32 to vector<16x1xi32>
    %52 = arith.cmpi slt, %50, %51 : vector<16x1xi32>
    %53 = arith.andi %48, %52 : vector<16x1xi1>
    %cst_20 = arith.constant 0.000000e+00 : f32
    %54 = vector.shape_cast %53 : vector<16x1xi1> to vector<16x1xi1>
    %55 = vector.broadcast %54 : vector<16x1xi1> to vector<16x32xi1>
    %56 = vector.broadcast %cst_20 : f32 to vector<16x32xf32>
    %57 = arith.select %55, %44, %56 : vector<16x32xi1>, vector<16x32xf32>
    %58 = arith.truncf %57 : vector<16x32xf32> to vector<16x32xbf16>
    %c2 = arith.constant 2 : index
    %c0_21 = arith.constant 0 : index
    %c0_22 = arith.constant 0 : index
    %59 = vector.load %arg2[%c2, %c0_21, %c0_22] : memref<3x32x32xbf16, #tpu.memory_space<vmem>>, vector<1x32x32xbf16>
    %60 = vector.shape_cast %59 : vector<1x32x32xbf16> to vector<32x32xbf16>
    %cst_23 = arith.constant dense<0.000000e+00> : vector<16x32xf32>
    %61 = tpu.matmul %58, %60, %cst_23 {dimension_numbers = #tpu.dot_dimension_numbers<[1], [0], [0], [1], [0, 0, 1, 1], [], []>} : vector<16x32xbf16>, vector<32x32xbf16>, vector<16x32xf32> -> vector<16x32xf32>
    %62 = arith.addf %43, %61 : vector<16x32xf32>
    %c0_24 = arith.constant 0 : index
    %c0_25 = arith.constant 0 : index
    %63 = vector.load %arg3[%c0_24, %c0_25] : memref<1x32xf32, #tpu.memory_space<vmem>>, vector<1x32xf32>
    %64 = vector.broadcast %63 : vector<1x32xf32> to vector<16x32xf32>
    %65 = arith.addf %62, %64 : vector<16x32xf32>
    %cst_26 = arith.constant 0.000000e+00 : f32
    %66 = vector.broadcast %cst_26 : f32 to vector<16x32xf32>
    %67 = arith.maximumf %65, %66 : vector<16x32xf32>
    %cst_27 = arith.constant 0.000000e+00 : f32
    %68 = vector.broadcast %cst_27 : f32 to vector<16x32xf32>
    %c1_i32_28 = arith.constant 1 : i32
    %69 = tpu.dynamic_rotate %67 by %c1_i32_28 dim 0 : vector<16x32xf32>, i32 -> vector<16x32xf32>
    %c-1_i32_29 = arith.constant -1 : i32
    %70 = vector.broadcast %c-1_i32_29 : i32 to vector<16x1xi32>
    %71 = arith.addi %16, %70 : vector<16x1xi32>
    %c0_i32_30 = arith.constant 0 : i32
    %72 = vector.broadcast %c0_i32_30 : i32 to vector<16x1xi32>
    %73 = arith.cmpi sge, %71, %72 : vector<16x1xi32>
    %c-1_i32_31 = arith.constant -1 : i32
    %74 = vector.broadcast %c-1_i32_31 : i32 to vector<16x1xi32>
    %75 = arith.addi %16, %74 : vector<16x1xi32>
    %c8_i32_32 = arith.constant 8 : i32
    %76 = vector.broadcast %c8_i32_32 : i32 to vector<16x1xi32>
    %77 = arith.cmpi slt, %75, %76 : vector<16x1xi32>
    %78 = arith.andi %73, %77 : vector<16x1xi1>
    %cst_33 = arith.constant 0.000000e+00 : f32
    %79 = vector.shape_cast %78 : vector<16x1xi1> to vector<16x1xi1>
    %80 = vector.broadcast %79 : vector<16x1xi1> to vector<16x32xi1>
    %81 = vector.broadcast %cst_33 : f32 to vector<16x32xf32>
    %82 = arith.select %80, %69, %81 : vector<16x32xi1>, vector<16x32xf32>
    %83 = arith.truncf %82 : vector<16x32xf32> to vector<16x32xbf16>
    %c0_34 = arith.constant 0 : index
    %c0_35 = arith.constant 0 : index
    %c0_36 = arith.constant 0 : index
    %84 = vector.load %arg4[%c0_34, %c0_35, %c0_36] : memref<3x32x32xbf16, #tpu.memory_space<vmem>>, vector<1x32x32xbf16>
    %85 = vector.shape_cast %84 : vector<1x32x32xbf16> to vector<32x32xbf16>
    %cst_37 = arith.constant dense<0.000000e+00> : vector<16x32xf32>
    %86 = tpu.matmul %83, %85, %cst_37 {dimension_numbers = #tpu.dot_dimension_numbers<[1], [0], [0], [1], [0, 0, 1, 1], [], []>} : vector<16x32xbf16>, vector<32x32xbf16>, vector<16x32xf32> -> vector<16x32xf32>
    %87 = arith.addf %68, %86 : vector<16x32xf32>
    %88 = arith.truncf %67 : vector<16x32xf32> to vector<16x32xbf16>
    %c1_38 = arith.constant 1 : index
    %c0_39 = arith.constant 0 : index
    %c0_40 = arith.constant 0 : index
    %89 = vector.load %arg4[%c1_38, %c0_39, %c0_40] : memref<3x32x32xbf16, #tpu.memory_space<vmem>>, vector<1x32x32xbf16>
    %90 = vector.shape_cast %89 : vector<1x32x32xbf16> to vector<32x32xbf16>
    %cst_41 = arith.constant dense<0.000000e+00> : vector<16x32xf32>
    %91 = tpu.matmul %88, %90, %cst_41 {dimension_numbers = #tpu.dot_dimension_numbers<[1], [0], [0], [1], [0, 0, 1, 1], [], []>} : vector<16x32xbf16>, vector<32x32xbf16>, vector<16x32xf32> -> vector<16x32xf32>
    %92 = arith.addf %87, %91 : vector<16x32xf32>
    %c15_i32_42 = arith.constant 15 : i32
    %93 = tpu.dynamic_rotate %67 by %c15_i32_42 dim 0 : vector<16x32xf32>, i32 -> vector<16x32xf32>
    %c1_i32_43 = arith.constant 1 : i32
    %94 = vector.broadcast %c1_i32_43 : i32 to vector<16x1xi32>
    %95 = arith.addi %16, %94 : vector<16x1xi32>
    %c0_i32_44 = arith.constant 0 : i32
    %96 = vector.broadcast %c0_i32_44 : i32 to vector<16x1xi32>
    %97 = arith.cmpi sge, %95, %96 : vector<16x1xi32>
    %c1_i32_45 = arith.constant 1 : i32
    %98 = vector.broadcast %c1_i32_45 : i32 to vector<16x1xi32>
    %99 = arith.addi %16, %98 : vector<16x1xi32>
    %c8_i32_46 = arith.constant 8 : i32
    %100 = vector.broadcast %c8_i32_46 : i32 to vector<16x1xi32>
    %101 = arith.cmpi slt, %99, %100 : vector<16x1xi32>
    %102 = arith.andi %97, %101 : vector<16x1xi1>
    %cst_47 = arith.constant 0.000000e+00 : f32
    %103 = vector.shape_cast %102 : vector<16x1xi1> to vector<16x1xi1>
    %104 = vector.broadcast %103 : vector<16x1xi1> to vector<16x32xi1>
    %105 = vector.broadcast %cst_47 : f32 to vector<16x32xf32>
    %106 = arith.select %104, %93, %105 : vector<16x32xi1>, vector<16x32xf32>
    %107 = arith.truncf %106 : vector<16x32xf32> to vector<16x32xbf16>
    %c2_48 = arith.constant 2 : index
    %c0_49 = arith.constant 0 : index
    %c0_50 = arith.constant 0 : index
    %108 = vector.load %arg4[%c2_48, %c0_49, %c0_50] : memref<3x32x32xbf16, #tpu.memory_space<vmem>>, vector<1x32x32xbf16>
    %109 = vector.shape_cast %108 : vector<1x32x32xbf16> to vector<32x32xbf16>
    %cst_51 = arith.constant dense<0.000000e+00> : vector<16x32xf32>
    %110 = tpu.matmul %107, %109, %cst_51 {dimension_numbers = #tpu.dot_dimension_numbers<[1], [0], [0], [1], [0, 0, 1, 1], [], []>} : vector<16x32xbf16>, vector<32x32xbf16>, vector<16x32xf32> -> vector<16x32xf32>
    %111 = arith.addf %92, %110 : vector<16x32xf32>
    %c0_52 = arith.constant 0 : index
    %c0_53 = arith.constant 0 : index
    %112 = vector.load %arg5[%c0_52, %c0_53] : memref<1x32xf32, #tpu.memory_space<vmem>>, vector<1x32xf32>
    %113 = vector.broadcast %112 : vector<1x32xf32> to vector<16x32xf32>
    %114 = arith.addf %111, %113 : vector<16x32xf32>
    %cst_54 = arith.constant 0.000000e+00 : f32
    %115 = vector.broadcast %cst_54 : f32 to vector<16x32xf32>
    %116 = arith.maximumf %114, %115 : vector<16x32xf32>
    %117 = vector.shape_cast %116 : vector<16x32xf32> to vector<2x8x32xf32>
    %c0_55 = arith.constant 0 : index
    %c0_56 = arith.constant 0 : index
    %118 = vector.load %arg6[%c0_55, %c0_56] : memref<8x1xf32, #tpu.memory_space<vmem>>, vector<8x1xf32>
    %119 = vector.shape_cast %118 : vector<8x1xf32> to vector<1x8x1xf32>
    %120 = vector.broadcast %119 : vector<1x8x1xf32> to vector<2x8x32xf32>
    %121 = arith.mulf %117, %120 : vector<2x8x32xf32>
    %cst_57 = arith.constant dense<0.000000e+00> : vector<2x32xf32>
    %122 = vector.multi_reduction <add>, %121, %cst_57 [1] : vector<2x8x32xf32> to vector<2x32xf32>
    %c0_58 = arith.constant 0 : index
    %c0_59 = arith.constant 0 : index
    %123 = memref.load %arg7[%c0_58, %c0_59] : memref<1x1xf32, #tpu.memory_space<smem>>
    %124 = vector.broadcast %123 : f32 to vector<2x32xf32>
    %125 = arith.addf %122, %124 : vector<2x32xf32>
    %cst_60 = arith.constant 0.000000e+00 : f32
    %126 = vector.broadcast %cst_60 : f32 to vector<2x32xf32>
    %127 = arith.maximumf %125, %126 : vector<2x32xf32>
    %128 = arith.truncf %127 : vector<2x32xf32> to vector<2x32xbf16>
    %c0_61 = arith.constant 0 : index
    %c0_62 = arith.constant 0 : index
    %129 = vector.load %arg8[%c0_61, %c0_62] : memref<32x32xbf16, #tpu.memory_space<vmem>>, vector<32x32xbf16>
    %cst_63 = arith.constant dense<0.000000e+00> : vector<2x32xf32>
    %130 = tpu.matmul %128, %129, %cst_63 {dimension_numbers = #tpu.dot_dimension_numbers<[1], [0], [0], [1], [0, 0, 1, 1], [], []>} : vector<2x32xbf16>, vector<32x32xbf16>, vector<2x32xf32> -> vector<2x32xf32>
    %c0_64 = arith.constant 0 : index
    %c0_65 = arith.constant 0 : index
    %131 = vector.load %arg9[%c0_64, %c0_65] : memref<1x32xf32, #tpu.memory_space<vmem>>, vector<1x32xf32>
    %132 = vector.broadcast %131 : vector<1x32xf32> to vector<2x32xf32>
    %133 = arith.addf %130, %132 : vector<2x32xf32>
    %cst_66 = arith.constant 0.000000e+00 : f32
    %134 = vector.broadcast %cst_66 : f32 to vector<2x32xf32>
    %135 = arith.maximumf %133, %134 : vector<2x32xf32>
    %136 = arith.truncf %135 : vector<2x32xf32> to vector<2x32xbf16>
    %c0_67 = arith.constant 0 : index
    %c0_68 = arith.constant 0 : index
    %137 = vector.load %arg10[%c0_67, %c0_68] : memref<32x32xbf16, #tpu.memory_space<vmem>>, vector<32x32xbf16>
    %cst_69 = arith.constant dense<0.000000e+00> : vector<2x32xf32>
    %138 = tpu.matmul %136, %137, %cst_69 {dimension_numbers = #tpu.dot_dimension_numbers<[1], [0], [0], [1], [0, 0, 1, 1], [], []>} : vector<2x32xbf16>, vector<32x32xbf16>, vector<2x32xf32> -> vector<2x32xf32>
    %c0_70 = arith.constant 0 : index
    %c0_71 = arith.constant 0 : index
    %139 = vector.load %arg11[%c0_70, %c0_71] : memref<1x32xf32, #tpu.memory_space<vmem>>, vector<1x32xf32>
    %140 = vector.broadcast %139 : vector<1x32xf32> to vector<2x32xf32>
    %141 = arith.addf %138, %140 : vector<2x32xf32>
    %c0_72 = arith.constant 0 : index
    %c0_73 = arith.constant 0 : index
    %142 = vector.load %arg12[%c0_72, %c0_73] : memref<2x32xf32, #tpu.memory_space<vmem>>, vector<2x32xf32>
    tpu.vector_store %arg12[%c0_72, %c0_73], %141 {strides = array<i32>} : memref<2x32xf32, #tpu.memory_space<vmem>>, vector<2x32xf32>,
    return
  }
  func.func @transform_0(%arg0: i32) -> (i32, i32) {
    %c0_i32 = arith.constant 0 : i32
    %c0_i32_0 = arith.constant 0 : i32
    return %arg0, %c0_i32 : i32, i32
  }
  func.func @transform_1(%arg0: i32) -> (i32, i32, i32) {
    %c0_i32 = arith.constant 0 : i32
    %c0_i32_0 = arith.constant 0 : i32
    %c0_i32_1 = arith.constant 0 : i32
    %c0_i32_2 = arith.constant 0 : i32
    return %c0_i32, %c0_i32_0, %c0_i32_1 : i32, i32, i32
  }
  func.func @transform_2(%arg0: i32) -> (i32, i32) {
    %c0_i32 = arith.constant 0 : i32
    %c0_i32_0 = arith.constant 0 : i32
    %c0_i32_1 = arith.constant 0 : i32
    return %c0_i32, %c0_i32_0 : i32, i32
  }
  func.func @transform_3(%arg0: i32) -> (i32, i32, i32) {
    %c0_i32 = arith.constant 0 : i32
    %c0_i32_0 = arith.constant 0 : i32
    %c0_i32_1 = arith.constant 0 : i32
    %c0_i32_2 = arith.constant 0 : i32
    return %c0_i32, %c0_i32_0, %c0_i32_1 : i32, i32, i32
  }
  func.func @transform_4(%arg0: i32) -> (i32, i32) {
    %c0_i32 = arith.constant 0 : i32
    %c0_i32_0 = arith.constant 0 : i32
    %c0_i32_1 = arith.constant 0 : i32
    return %c0_i32, %c0_i32_0 : i32, i32
  }
  func.func @transform_5(%arg0: i32) -> (i32, i32) {
    %c0_i32 = arith.constant 0 : i32
    %c0_i32_0 = arith.constant 0 : i32
    %c0_i32_1 = arith.constant 0 : i32
    return %c0_i32, %c0_i32_0 : i32, i32
  }
  func.func @transform_6(%arg0: i32) -> (i32, i32) {
    %c0_i32 = arith.constant 0 : i32
    %c0_i32_0 = arith.constant 0 : i32
    %c0_i32_1 = arith.constant 0 : i32
    return %c0_i32, %c0_i32_0 : i32, i32
  }
  func.func @transform_7(%arg0: i32) -> (i32, i32) {
    %c0_i32 = arith.constant 0 : i32
    %c0_i32_0 = arith.constant 0 : i32
    %c0_i32_1 = arith.constant 0 : i32
    return %c0_i32, %c0_i32_0 : i32, i32
  }
  func.func @transform_8(%arg0: i32) -> (i32, i32) {
    %c0_i32 = arith.constant 0 : i32
    %c0_i32_0 = arith.constant 0 : i32
    %c0_i32_1 = arith.constant 0 : i32
    return %c0_i32, %c0_i32_0 : i32, i32
  }
  func.func @transform_9(%arg0: i32) -> (i32, i32) {
    %c0_i32 = arith.constant 0 : i32
    %c0_i32_0 = arith.constant 0 : i32
    %c0_i32_1 = arith.constant 0 : i32
    return %c0_i32, %c0_i32_0 : i32, i32
  }
  func.func @transform_10(%arg0: i32) -> (i32, i32) {
    %c0_i32 = arith.constant 0 : i32
    %c0_i32_0 = arith.constant 0 : i32
    %c0_i32_1 = arith.constant 0 : i32
    return %c0_i32, %c0_i32_0 : i32, i32
  }
  func.func @transform_11(%arg0: i32) -> (i32, i32) {
    %c0_i32 = arith.constant 0 : i32
    %c0_i32_0 = arith.constant 0 : i32
    return %arg0, %c0_i32 : i32, i32
  }
}

</mosaic_0001>

<llo_original>
// kernel: tpu_custom_call.1
$region0: #{tpu_custom_call.1}
  #allocation0 [shape = 'u32[]', space=smem, size = 0x4, offset = 0x4, fixed_abs, tag = 'smem constant byte address 0x4 - core index']
  #allocation1 [shape = 'u32[144,128]{1,0:T(1,128)}', space=vmem, size = 0x12000, scoped, tag = 'internal scratch']
  #allocation2 [shape = 'f32[1,1]{1,0:T(1,128)S(6)}', space=smem, size = 0x200, scoped, tag = 'scoped memory for tpu_custom_call.1']
  %s0 = inlined_call_operand.hbm [shape: bf16[16,32], index: 0, kind: input, shape index: {}]
  %s1 = inlined_call_operand.hbm [shape: bf16[3,32,32], index: 1, kind: input, shape index: {}]
  %s2 = inlined_call_operand.vmem [shape: f32[1,32], index: 2, kind: input, shape index: {}]
  %s3 = inlined_call_operand.hbm [shape: bf16[3,32,32], index: 3, kind: input, shape index: {}]
  %s4 = inlined_call_operand.vmem [shape: f32[1,32], index: 4, kind: input, shape index: {}]
  %s5 = inlined_call_operand.vmem [shape: f32[8,1], index: 5, kind: input, shape index: {}]
  %s6 = inlined_call_operand.<no memory space> [shape: f32[1,1], index: 6, kind: input, shape index: {}]
  %s7 = inlined_call_operand.vmem [shape: bf16[32,32], index: 7, kind: input, shape index: {}]
  %s8 = inlined_call_operand.vmem [shape: f32[1,32], index: 8, kind: input, shape index: {}]
  %s9 = inlined_call_operand.vmem [shape: bf16[32,32], index: 9, kind: input, shape index: {}]
  %s10 = inlined_call_operand.vmem [shape: f32[1,32], index: 10, kind: input, shape index: {}]
  %s11 = inlined_call_operand.hbm [shape: f32[2,32], index: 11, kind: output, shape index: {}]
  %s12 = sld [smem:[#allocation0]]
  $region66: #{tpu_custom_call.1} parent=0
    _
  %s14 = ssub.s32 1, %s12
  %s15 = scalar_select 0, %s14, %s12
  %16 = sst [smem:[#allocation2]] %s6
  $region1: #{tpu_custom_call.1} parent=0
    #allocation3 [shape = 'u8[4096]{0}', space=vmem, size = 0x1000, scoped, tag = 'input window, operand 0, single buffered']
    #allocation4 [shape = 's32[1]{0}', space=sflag, size = 0x4, scoped, tag = 'scoped memory for tpu_custom_call.1']
    #allocation5 [shape = 's32[1]{0}', space=sflag, size = 0x4, scoped, tag = 'scoped memory for tpu_custom_call.1']
    #allocation6 [shape = 'u8[24576]{0}', space=vmem, size = 0x6000, scoped, tag = 'input window, operand 1, single buffered']
    #allocation7 [shape = 's32[1]{0}', space=sflag, size = 0x4, scoped, tag = 'scoped memory for tpu_custom_call.1']
    #allocation8 [shape = 'u8[24576]{0}', space=vmem, size = 0x6000, scoped, tag = 'input window, operand 3, single buffered']
    #allocation9 [shape = 'u8[1024]{0}', space=vmem, size = 0x400, scoped, tag = 'output window, operand 0, single buffered']
    %17 = vsyncpa [#allocation4], 0
    %18 = vsyncpa [#allocation7], 0
    %19 = vsyncpa [#allocation5], 0
    // Predicated region
    $region2: #{tpu_custom_call.1} parent=1 // pred_check
      _
    $region3: #{tpu_custom_call.1} parent=1 // pred_check_branch
      %21 = sbr.rel (0) target = $region5
    $region4: #{tpu_custom_call.1} parent=1 // pred_region
      %s23 = ssub.s32 128, 128
      %24 = vsyncadd [#allocation4], %s23
      %s25 = sshll.u32 [#allocation3], 4
      %s26 = int_to_ptr.vmem [resolvable:$true] %s25
      %31 = dma.hbm_to_vmem [thread:$0]  %s0, 128, %s26, [#allocation4], 64, 64, 4
    $region5: #{tpu_custom_call.1} parent=1 // pred_fallthru
      _
    // Predicated region
    $region6: #{tpu_custom_call.1} parent=1 // pred_check
      _
    $region7: #{tpu_custom_call.1} parent=1 // pred_check_branch
      %33 = sbr.rel (0) target = $region9
    $region8: #{tpu_custom_call.1} parent=1 // pred_region
      %s35 = ssub.s32 768, 768
      %36 = vsyncadd [#allocation7], %s35
      %s37 = sshll.u32 [#allocation6], 4
      %s38 = int_to_ptr.vmem [resolvable:$true] %s37
      %43 = dma.hbm_to_vmem [thread:$0]  %s1, 768, %s38, [#allocation7], 64, 64, 4
    $region9: #{tpu_custom_call.1} parent=1 // pred_fallthru
      _
    // Predicated region
    $region10: #{tpu_custom_call.1} parent=1 // pred_check
      _
    $region11: #{tpu_custom_call.1} parent=1 // pred_check_branch
      %45 = sbr.rel (0) target = $region13
    $region12: #{tpu_custom_call.1} parent=1 // pred_region
      _
    $region13: #{tpu_custom_call.1} parent=1 // pred_fallthru
      _
    // Predicated region
    $region14: #{tpu_custom_call.1} parent=1 // pred_check
      _
    $region15: #{tpu_custom_call.1} parent=1 // pred_check_branch
      %47 = sbr.rel (0) target = $region17
    $region16: #{tpu_custom_call.1} parent=1 // pred_region
      %s49 = ssub.s32 768, 768
      %50 = vsyncadd [#allocation7], %s49
      %s51 = sshll.u32 [#allocation8], 4
      %s52 = int_to_ptr.vmem [resolvable:$true] %s51
      %57 = dma.hbm_to_vmem [thread:$0]  %s3, 768, %s52, [#allocation7], 64, 64, 4
    $region17: #{tpu_custom_call.1} parent=1 // pred_fallthru
      _
    // Predicated region
    $region18: #{tpu_custom_call.1} parent=1 // pred_check
      _
    $region19: #{tpu_custom_call.1} parent=1 // pred_check_branch
      %59 = sbr.rel (0) target = $region21
    $region20: #{tpu_custom_call.1} parent=1 // pred_region
      _
    $region21: #{tpu_custom_call.1} parent=1 // pred_fallthru
      _
    // Predicated region
    $region22: #{tpu_custom_call.1} parent=1 // pred_check
      _
    $region23: #{tpu_custom_call.1} parent=1 // pred_check_branch
      %61 = sbr.rel (0) target = $region25
    $region24: #{tpu_custom_call.1} parent=1 // pred_region
      _
    $region25: #{tpu_custom_call.1} parent=1 // pred_fallthru
      _
    // Predicated region
    $region26: #{tpu_custom_call.1} parent=1 // pred_check
      _
    $region27: #{tpu_custom_call.1} parent=1 // pred_check_branch
      %63 = sbr.rel (0) target = $region29
    $region28: #{tpu_custom_call.1} parent=1 // pred_region
      _
    $region29: #{tpu_custom_call.1} parent=1 // pred_fallthru
      _
    // Predicated region
    $region30: #{tpu_custom_call.1} parent=1 // pred_check
      _
    $region31: #{tpu_custom_call.1} parent=1 // pred_check_branch
      %65 = sbr.rel (0) target = $region33
    $region32: #{tpu_custom_call.1} parent=1 // pred_region
      _
    $region33: #{tpu_custom_call.1} parent=1 // pred_fallthru
      _
    // Predicated region
    $region34: #{tpu_custom_call.1} parent=1 // pred_check
      _
    $region35: #{tpu_custom_call.1} parent=1 // pred_check_branch
      %67 = sbr.rel (0) target = $region37
    $region36: #{tpu_custom_call.1} parent=1 // pred_region
      _
    $region37: #{tpu_custom_call.1} parent=1 // pred_fallthru
      _
    // Predicated region
    $region38: #{tpu_custom_call.1} parent=1 // pred_check
      _
    $region39: #{tpu_custom_call.1} parent=1 // pred_check_branch
      %69 = sbr.rel (0) target = $region41
    $region40: #{tpu_custom_call.1} parent=1 // pred_region
      _
    $region41: #{tpu_custom_call.1} parent=1 // pred_fallthru
      _
    // Predicated region
    $region42: #{tpu_custom_call.1} parent=1 // pred_check
      _
    $region43: #{tpu_custom_call.1} parent=1 // pred_check_branch
      %71 = sbr.rel (0) target = $region45
    $region44: #{tpu_custom_call.1} parent=1 // pred_region
      _
    $region45: #{tpu_custom_call.1} parent=1 // pred_fallthru
      _
    // Predicated region
    $region46: #{tpu_custom_call.1} parent=1 // pred_check
      _
    $region47: #{tpu_custom_call.1} parent=1 // pred_check_branch
      %73 = sbr.rel (0) target = $region49
    $region48: #{tpu_custom_call.1} parent=1 // pred_region
      %74 = dma.done [#allocation4], 128
    $region49: #{tpu_custom_call.1} parent=1 // pred_fallthru
      _
    // Predicated region
    $region50: #{tpu_custom_call.1} parent=1 // pred_check
      _
    $region51: #{tpu_custom_call.1} parent=1 // pred_check_branch
      %76 = sbr.rel (0) target = $region53
    $region52: #{tpu_custom_call.1} parent=1 // pred_region
      %77 = dma.done [#allocation7], 768
    $region53: #{tpu_custom_call.1} parent=1 // pred_fallthru
      _
    // Predicated region
    $region54: #{tpu_custom_call.1} parent=1 // pred_check
      _
    $region55: #{tpu_custom_call.1} parent=1 // pred_check_branch
      %79 = sbr.rel (0) target = $region57
    $region56: #{tpu_custom_call.1} parent=1 // pred_region
      %80 = dma.done [#allocation7], 768
    $region57: #{tpu_custom_call.1} parent=1 // pred_fallthru
      _
    %v82 = vlaneseq
    %v83 = vshrl.u32 %v82, 7
    %v84 = vadd.s32 %v83, 8
    %vm85 = vcmp.lt.s32.totalorder %v83, 0
    %v86 = vsub.s32 0, %v83
    %v87 = vsel %vm85, %v86, %v83
    %v88 = vshrl.u32 %v87, 3
    %v89 = vand.u32 %v87, 7
    %v90 = vsub.s32 0, %v89
    %v91 = vsel %vm85, %v90, %v89
    %vm92 = vcmp.lt.s32.totalorder %v84, 0
    %v93 = vsub.s32 0, %v84
    %v94 = vsel %vm92, %v93, %v84
    %v95 = vshrl.u32 %v94, 3
    %v96 = vand.u32 %v94, 7
    %v97 = vsub.s32 0, %v96
    %v98 = vsel %vm92, %v97, %v96
    %vm99 = vcmp.ne.s32.totalorder %v91, 0
    %vm100 = vcmp.ne.s32.totalorder %v98, 0
    %vm101 = vcmp.lt.s32.totalorder %v91, 0
    %vm102 = vcmp.lt.s32.totalorder %v98, 0
    %vm103 = vmand %vm101, %vm99
    %vm104 = vmand %vm102, %vm100
    %v105 = vadd.s32 %v91, 8
    %v106 = vadd.s32 %v98, 8
    %v107 = vsel %vm103, %v105, %v91
    %v108 = vsel %vm104, %v106, %v98
    %v109 = vld [vmem:[#allocation3] sm:$0xf]
    %v110 = vld [vmem:[#allocation3 + $0x4] sm:$0xf]
    %v111 = vunpack.c.l.bf16 %v109
    %v112 = vunpack.c.l.bf16 %v110
    %v113 = vrot.slane %v111, 7
    %v114 = vrot.slane %v112, 7
    %vm115 = vcmp.lt.s32.totalorder %v83, 1
    %v116 = vsel %vm115, %v113, %v114
    %v117 = vsel %vm115, %v114, %v113
    %v118 = vadd.s32 %v107, 4294967295
    %v119 = vadd.s32 %v108, 4294967295
    %vm120 = vcmp.ge.s32.totalorder %v118, 0
    %vm121 = vcmp.ge.s32.totalorder %v119, 0
    %vm122 = vcmp.lt.s32.totalorder %v118, 8
    %vm123 = vcmp.lt.s32.totalorder %v119, 8
    %vm124 = vmand %vm120, %vm122
    %vm125 = vmand %vm121, %vm123
    %v126 = vsel %vm124, 1, 0
    %v127 = vsel %vm125, 1, 0
    %vm128 = vcmp.eq.s32.totalorder %v126, 1
    %vm129 = vcmp.eq.s32.totalorder %v127, 1
    %v130 = vsel %vm128, %v117, 0.0
    %v131 = vsel %vm129, %v116, 0.0
    %v132 = vpack.c.bf16 %v131, %v130
    %v133 = vld [vmem:[#allocation6] sm:$0xf]
    %v134 = vld [vmem:[#allocation6 + $0x4] sm:$0xf]
    %v135 = vld [vmem:[#allocation6 + $0x8] sm:$0xf]
    %v136 = vld [vmem:[#allocation6 + $0xc] sm:$0xf]
    %s137 = scalar_lea.vmem [#allocation6], 16
    %v138 = vld [vmem:[%s137] sm:$0xf]
    %v139 = vld [vmem:[%s137 + $0x4] sm:$0xf]
    %v140 = vld [vmem:[%s137 + $0x8] sm:$0xf]
    %v141 = vld [vmem:[%s137 + $0xc] sm:$0xf]
    %v144 = vunpack.c.l.b16 %v109
    %v145 = vunpack.c.l.b16 %v110
    %v146 = vpack.c.b16 %v145, %v144
    %v151 = vunpack.c.l.b16 %v138
    %v152 = vunpack.c.l.b16 %v139
    %v153 = vunpack.c.l.b16 %v140
    %v154 = vunpack.c.l.b16 %v141
    %v155 = vpack.c.b16 %v152, %v151
    %v156 = vpack.c.b16 %v154, %v153
    %vm159 = vcmask 261120
    %v161 = vsel %vm159, %v146, 0
    %163 = vmatprep.subr.bf16.mxu0 0
    %164 = vmatpush1.bf16.msra.mxu0 %v155
    %165 = vmatprep.subr.bf16.mxu0 0
    %166 = vmatpush1.bf16.msra.mxu0 %v156
    %167 = vmatprep.subr.bf16.mxu0 0
    %168 = vmatpush1.bf16.msra.mxu0 0
    %169 = vmatprep.subr.bf16.mxu0 0
    %170 = vmatpush1.bf16.msra.mxu0 0
    %171 = vmatprep.subr.bf16.mxu0 0
    %172 = vmatpush1.bf16.msra.mxu0 0
    %173 = vmatprep.subr.bf16.mxu0 0
    %174 = vmatpush1.bf16.msra.mxu0 0
    %175 = vmatprep.subr.bf16.mxu0 0
    %176 = vmatpush1.bf16.msra.mxu0 0
    %177 = vmatprep.subr.bf16.mxu0 0
    %178 = vmatpush1.bf16.msra.mxu0 0
    %179 = vmatprep.subr.bf16.mxu0 0
    %180 = vmatpush1.bf16.msra.mxu0 0
    %181 = vmatprep.subr.bf16.mxu0 0
    %182 = vmatpush1.bf16.msra.mxu0 0
    %183 = vmatprep.subr.bf16.mxu0 0
    %184 = vmatpush1.bf16.msra.mxu0 0
    %185 = vmatprep.subr.bf16.mxu0 0
    %186 = vmatpush1.bf16.msra.mxu0 0
    %187 = vmatprep.subr.bf16.mxu0 0
    %188 = vmatpush1.bf16.msra.mxu0 0
    %189 = vmatprep.subr.bf16.mxu0 0
    %190 = vmatpush1.bf16.msra.mxu0 0
    %191 = vmatprep.subr.bf16.mxu0 0
    %192 = vmatpush1.bf16.msra.mxu0 0
    %193 = vmatprep.subr.bf16.mxu0 0
    %194 = vmatpush1.bf16.msra.mxu0 0
    %195 = vmatprep.mubr.bf16.mxu0 0
    %196 = vmatmul.mubr.bf16.gmra.mrb[0].mxu0 %v161
    %v197 = vpop.f32.mrb[0].mxu0
    %v198 = vadd.f32 0.0, %v197
    %v199 = vpop.f32.mrb[0].mxu0
    %v200 = vpop.f32.mrb[0].mxu0
    %v201 = vadd.f32 0.0, %v200
    %v202 = vpop.f32.mrb[0].mxu0
    %203 = vdwg.mxu0
    %v208 = vunpack.c.l.b16 %v133
    %v209 = vunpack.c.l.b16 %v134
    %v210 = vunpack.c.l.b16 %v135
    %v211 = vunpack.c.l.b16 %v136
    %v212 = vpack.c.b16 %v209, %v208
    %v213 = vpack.c.b16 %v211, %v210
    %v217 = vsel %vm159, %v132, 0
    %219 = vmatprep.subr.bf16.mxu0 0
    %220 = vmatpush1.bf16.msra.mxu0 %v212
    %221 = vmatprep.subr.bf16.mxu0 0
    %222 = vmatpush1.bf16.msra.mxu0 %v213
    %223 = vmatprep.subr.bf16.mxu0 0
    %224 = vmatpush1.bf16.msra.mxu0 0
    %225 = vmatprep.subr.bf16.mxu0 0
    %226 = vmatpush1.bf16.msra.mxu0 0
    %227 = vmatprep.subr.bf16.mxu0 0
    %228 = vmatpush1.bf16.msra.mxu0 0
    %229 = vmatprep.subr.bf16.mxu0 0
    %230 = vmatpush1.bf16.msra.mxu0 0
    %231 = vmatprep.subr.bf16.mxu0 0
    %232 = vmatpush1.bf16.msra.mxu0 0
    %233 = vmatprep.subr.bf16.mxu0 0
    %234 = vmatpush1.bf16.msra.mxu0 0
    %235 = vmatprep.subr.bf16.mxu0 0
    %236 = vmatpush1.bf16.msra.mxu0 0
    %237 = vmatprep.subr.bf16.mxu0 0
    %238 = vmatpush1.bf16.msra.mxu0 0
    %239 = vmatprep.subr.bf16.mxu0 0
    %240 = vmatpush1.bf16.msra.mxu0 0
    %241 = vmatprep.subr.bf16.mxu0 0
    %242 = vmatpush1.bf16.msra.mxu0 0
    %243 = vmatprep.subr.bf16.mxu0 0
    %244 = vmatpush1.bf16.msra.mxu0 0
    %245 = vmatprep.subr.bf16.mxu0 0
    %246 = vmatpush1.bf16.msra.mxu0 0
    %247 = vmatprep.subr.bf16.mxu0 0
    %248 = vmatpush1.bf16.msra.mxu0 0
    %249 = vmatprep.subr.bf16.mxu0 0
    %250 = vmatpush1.bf16.msra.mxu0 0
    %251 = vmatprep.mubr.bf16.mxu0 0
    %252 = vmatmul.mubr.bf16.gmra.mrb[0].mxu0 %v217
    %v253 = vpop.f32.mrb[0].mxu0
    %v254 = vadd.f32 %v198, %v253
    %v255 = vpop.f32.mrb[0].mxu0
    %v256 = vpop.f32.mrb[0].mxu0
    %v257 = vadd.f32 %v201, %v256
    %v258 = vpop.f32.mrb[0].mxu0
    %259 = vdwg.mxu0
    %v260 = vrot.slane %v111, 1
    %v261 = vrot.slane %v112, 1
    %vm262 = vcmp.lt.s32.totalorder %v83, 7
    %v263 = vsel %vm262, %v260, %v261
    %v264 = vsel %vm262, %v261, %v260
    %v265 = vadd.s32 %v107, 1
    %v266 = vadd.s32 %v108, 1
    %vm267 = vcmp.ge.s32.totalorder %v265, 0
    %vm268 = vcmp.ge.s32.totalorder %v266, 0
    %vm269 = vcmp.lt.s32.totalorder %v265, 8
    %vm270 = vcmp.lt.s32.totalorder %v266, 8
    %vm271 = vmand %vm267, %vm269
    %vm272 = vmand %vm268, %vm270
    %v273 = vsel %vm271, 1, 0
    %v274 = vsel %vm272, 1, 0
    %vm275 = vcmp.eq.s32.totalorder %v273, 1
    %vm276 = vcmp.eq.s32.totalorder %v274, 1
    %v277 = vsel %vm275, %v263, 0.0
    %v278 = vsel %vm276, %v264, 0.0
    %v279 = vpack.c.bf16 %v278, %v277
    %s280 = scalar_lea.vmem [#allocation6], 32
    %v281 = vld [vmem:[%s280] sm:$0xf]
    %v282 = vld [vmem:[%s280 + $0x4] sm:$0xf]
    %v283 = vld [vmem:[%s280 + $0x8] sm:$0xf]
    %v284 = vld [vmem:[%s280 + $0xc] sm:$0xf]
    %v289 = vunpack.c.l.b16 %v281
    %v290 = vunpack.c.l.b16 %v282
    %v291 = vunpack.c.l.b16 %v283
    %v292 = vunpack.c.l.b16 %v284
    %v293 = vpack.c.b16 %v290, %v289
    %v294 = vpack.c.b16 %v292, %v291
    %v298 = vsel %vm159, %v279, 0
    %300 = vmatprep.subr.bf16.mxu0 0
    %301 = vmatpush1.bf16.msra.mxu0 %v293
    %302 = vmatprep.subr.bf16.mxu0 0
    %303 = vmatpush1.bf16.msra.mxu0 %v294
    %304 = vmatprep.subr.bf16.mxu0 0
    %305 = vmatpush1.bf16.msra.mxu0 0
    %306 = vmatprep.subr.bf16.mxu0 0
    %307 = vmatpush1.bf16.msra.mxu0 0
    %308 = vmatprep.subr.bf16.mxu0 0
    %309 = vmatpush1.bf16.msra.mxu0 0
    %310 = vmatprep.subr.bf16.mxu0 0
    %311 = vmatpush1.bf16.msra.mxu0 0
    %312 = vmatprep.subr.bf16.mxu0 0
    %313 = vmatpush1.bf16.msra.mxu0 0
    %314 = vmatprep.subr.bf16.mxu0 0
    %315 = vmatpush1.bf16.msra.mxu0 0
    %316 = vmatprep.subr.bf16.mxu0 0
    %317 = vmatpush1.bf16.msra.mxu0 0
    %318 = vmatprep.subr.bf16.mxu0 0
    %319 = vmatpush1.bf16.msra.mxu0 0
    %320 = vmatprep.subr.bf16.mxu0 0
    %321 = vmatpush1.bf16.msra.mxu0 0
    %322 = vmatprep.subr.bf16.mxu0 0
    %323 = vmatpush1.bf16.msra.mxu0 0
    %324 = vmatprep.subr.bf16.mxu0 0
    %325 = vmatpush1.bf16.msra.mxu0 0
    %326 = vmatprep.subr.bf16.mxu0 0
    %327 = vmatpush1.bf16.msra.mxu0 0
    %328 = vmatprep.subr.bf16.mxu0 0
    %329 = vmatpush1.bf16.msra.mxu0 0
    %330 = vmatprep.subr.bf16.mxu0 0
    %331 = vmatpush1.bf16.msra.mxu0 0
    %332 = vmatprep.mubr.bf16.mxu0 0
    %333 = vmatmul.mubr.bf16.gmra.mrb[0].mxu0 %v298
    %v334 = vpop.f32.mrb[0].mxu0
    %v335 = vadd.f32 0.0, %v334
    %v336 = vpop.f32.mrb[0].mxu0
    %v337 = vpop.f32.mrb[0].mxu0
    %v338 = vadd.f32 0.0, %v337
    %v339 = vpop.f32.mrb[0].mxu0
    %340 = vdwg.mxu0
    %v341 = vadd.f32 %v254, %v335
    %v342 = vadd.f32 %v257, %v338
    %v343 = vld [vmem:[%s2] sm:$0x1]
    %v345 = vlaneseq
    %v346 = vshrl.u32 %v345, 7
    %v347 = vsub.s32 0, %v346
    %v348 = vrot.slane %v343, %v347
    %v350 = vadd.f32 %v341, %v348
    %v351 = vadd.f32 %v342, %v348
    %v352 = vmax.f32 %v350, 0.0
    %v353 = vmax.f32 %v351, 0.0
    %v354 = vrot.slane %v352, 7
    %v355 = vrot.slane %v353, 7
    %v356 = vsel %vm115, %v354, %v355
    %v357 = vsel %vm115, %v355, %v354
    %v358 = vsel %vm128, %v357, 0.0
    %v359 = vsel %vm129, %v356, 0.0
    %v360 = vpack.c.bf16 %v359, %v358
    %v361 = vld [vmem:[#allocation8] sm:$0xf]
    %v362 = vld [vmem:[#allocation8 + $0x4] sm:$0xf]
    %v363 = vld [vmem:[#allocation8 + $0x8] sm:$0xf]
    %v364 = vld [vmem:[#allocation8 + $0xc] sm:$0xf]
    %v365 = vpack.c.bf16 %v353, %v352
    %s366 = scalar_lea.vmem [#allocation8], 16
    %v367 = vld [vmem:[%s366] sm:$0xf]
    %v368 = vld [vmem:[%s366 + $0x4] sm:$0xf]
    %v369 = vld [vmem:[%s366 + $0x8] sm:$0xf]
    %v370 = vld [vmem:[%s366 + $0xc] sm:$0xf]
    %v375 = vunpack.c.l.b16 %v367
    %v376 = vunpack.c.l.b16 %v368
    %v377 = vunpack.c.l.b16 %v369
    %v378 = vunpack.c.l.b16 %v370
    %v379 = vpack.c.b16 %v376, %v375
    %v380 = vpack.c.b16 %v378, %v377
    %v384 = vsel %vm159, %v365, 0
    %386 = vmatprep.subr.bf16.mxu0 0
    %387 = vmatpush1.bf16.msra.mxu0 %v379
    %388 = vmatprep.subr.bf16.mxu0 0
    %389 = vmatpush1.bf16.msra.mxu0 %v380
    %390 = vmatprep.subr.bf16.mxu0 0
    %391 = vmatpush1.bf16.msra.mxu0 0
    %392 = vmatprep.subr.bf16.mxu0 0
    %393 = vmatpush1.bf16.msra.mxu0 0
    %394 = vmatprep.subr.bf16.mxu0 0
    %395 = vmatpush1.bf16.msra.mxu0 0
    %396 = vmatprep.subr.bf16.mxu0 0
    %397 = vmatpush1.bf16.msra.mxu0 0
    %398 = vmatprep.subr.bf16.mxu0 0
    %399 = vmatpush1.bf16.msra.mxu0 0
    %400 = vmatprep.subr.bf16.mxu0 0
    %401 = vmatpush1.bf16.msra.mxu0 0
    %402 = vmatprep.subr.bf16.mxu0 0
    %403 = vmatpush1.bf16.msra.mxu0 0
    %404 = vmatprep.subr.bf16.mxu0 0
    %405 = vmatpush1.bf16.msra.mxu0 0
    %406 = vmatprep.subr.bf16.mxu0 0
    %407 = vmatpush1.bf16.msra.mxu0 0
    %408 = vmatprep.subr.bf16.mxu0 0
    %409 = vmatpush1.bf16.msra.mxu0 0
    %410 = vmatprep.subr.bf16.mxu0 0
    %411 = vmatpush1.bf16.msra.mxu0 0
    %412 = vmatprep.subr.bf16.mxu0 0
    %413 = vmatpush1.bf16.msra.mxu0 0
    %414 = vmatprep.subr.bf16.mxu0 0
    %415 = vmatpush1.bf16.msra.mxu0 0
    %416 = vmatprep.subr.bf16.mxu0 0
    %417 = vmatpush1.bf16.msra.mxu0 0
    %418 = vmatprep.mubr.bf16.mxu0 0
    %419 = vmatmul.mubr.bf16.gmra.mrb[0].mxu0 %v384
    %v420 = vpop.f32.mrb[0].mxu0
    %v421 = vadd.f32 0.0, %v420
    %v422 = vpop.f32.mrb[0].mxu0
    %v423 = vpop.f32.mrb[0].mxu0
    %v424 = vadd.f32 0.0, %v423
    %v425 = vpop.f32.mrb[0].mxu0
    %426 = vdwg.mxu0
    %v431 = vunpack.c.l.b16 %v361
    %v432 = vunpack.c.l.b16 %v362
    %v433 = vunpack.c.l.b16 %v363
    %v434 = vunpack.c.l.b16 %v364
    %v435 = vpack.c.b16 %v432, %v431
    %v436 = vpack.c.b16 %v434, %v433
    %v440 = vsel %vm159, %v360, 0
    %442 = vmatprep.subr.bf16.mxu0 0
    %443 = vmatpush1.bf16.msra.mxu0 %v435
    %444 = vmatprep.subr.bf16.mxu0 0
    %445 = vmatpush1.bf16.msra.mxu0 %v436
    %446 = vmatprep.subr.bf16.mxu0 0
    %447 = vmatpush1.bf16.msra.mxu0 0
    %448 = vmatprep.subr.bf16.mxu0 0
    %449 = vmatpush1.bf16.msra.mxu0 0
    %450 = vmatprep.subr.bf16.mxu0 0
    %451 = vmatpush1.bf16.msra.mxu0 0
    %452 = vmatprep.subr.bf16.mxu0 0
    %453 = vmatpush1.bf16.msra.mxu0 0
    %454 = vmatprep.subr.bf16.mxu0 0
    %455 = vmatpush1.bf16.msra.mxu0 0
    %456 = vmatprep.subr.bf16.mxu0 0
    %457 = vmatpush1.bf16.msra.mxu0 0
    %458 = vmatprep.subr.bf16.mxu0 0
    %459 = vmatpush1.bf16.msra.mxu0 0
    %460 = vmatprep.subr.bf16.mxu0 0
    %461 = vmatpush1.bf16.msra.mxu0 0
    %462 = vmatprep.subr.bf16.mxu0 0
    %463 = vmatpush1.bf16.msra.mxu0 0
    %464 = vmatprep.subr.bf16.mxu0 0
    %465 = vmatpush1.bf16.msra.mxu0 0
    %466 = vmatprep.subr.bf16.mxu0 0
    %467 = vmatpush1.bf16.msra.mxu0 0
    %468 = vmatprep.subr.bf16.mxu0 0
    %469 = vmatpush1.bf16.msra.mxu0 0
    %470 = vmatprep.subr.bf16.mxu0 0
    %471 = vmatpush1.bf16.msra.mxu0 0
    %472 = vmatprep.subr.bf16.mxu0 0
    %473 = vmatpush1.bf16.msra.mxu0 0
    %474 = vmatprep.mubr.bf16.mxu0 0
    %475 = vmatmul.mubr.bf16.gmra.mrb[0].mxu0 %v440
    %v476 = vpop.f32.mrb[0].mxu0
    %v477 = vadd.f32 %v421, %v476
    %v478 = vpop.f32.mrb[0].mxu0
    %v479 = vpop.f32.mrb[0].mxu0
    %v480 = vadd.f32 %v424, %v479
    %v481 = vpop.f32.mrb[0].mxu0
    %482 = vdwg.mxu0
    %v483 = vrot.slane %v352, 1
    %v484 = vrot.slane %v353, 1
    %v485 = vsel %vm262, %v483, %v484
    %v486 = vsel %vm262, %v484, %v483
    %v487 = vsel %vm275, %v485, 0.0
    %v488 = vsel %vm276, %v486, 0.0
    %v489 = vpack.c.bf16 %v488, %v487
    %s490 = scalar_lea.vmem [#allocation8], 32
    %v491 = vld [vmem:[%s490] sm:$0xf]
    %v492 = vld [vmem:[%s490 + $0x4] sm:$0xf]
    %v493 = vld [vmem:[%s490 + $0x8] sm:$0xf]
    %v494 = vld [vmem:[%s490 + $0xc] sm:$0xf]
    %v499 = vunpack.c.l.b16 %v491
    %v500 = vunpack.c.l.b16 %v492
    %v501 = vunpack.c.l.b16 %v493
    %v502 = vunpack.c.l.b16 %v494
    %v503 = vpack.c.b16 %v500, %v499
    %v504 = vpack.c.b16 %v502, %v501
    %v508 = vsel %vm159, %v489, 0
    %510 = vmatprep.subr.bf16.mxu0 0
    %511 = vmatpush1.bf16.msra.mxu0 %v503
    %512 = vmatprep.subr.bf16.mxu0 0
    %513 = vmatpush1.bf16.msra.mxu0 %v504
    %514 = vmatprep.subr.bf16.mxu0 0
    %515 = vmatpush1.bf16.msra.mxu0 0
    %516 = vmatprep.subr.bf16.mxu0 0
    %517 = vmatpush1.bf16.msra.mxu0 0
    %518 = vmatprep.subr.bf16.mxu0 0
    %519 = vmatpush1.bf16.msra.mxu0 0
    %520 = vmatprep.subr.bf16.mxu0 0
    %521 = vmatpush1.bf16.msra.mxu0 0
    %522 = vmatprep.subr.bf16.mxu0 0
    %523 = vmatpush1.bf16.msra.mxu0 0
    %524 = vmatprep.subr.bf16.mxu0 0
    %525 = vmatpush1.bf16.msra.mxu0 0
    %526 = vmatprep.subr.bf16.mxu0 0
    %527 = vmatpush1.bf16.msra.mxu0 0
    %528 = vmatprep.subr.bf16.mxu0 0
    %529 = vmatpush1.bf16.msra.mxu0 0
    %530 = vmatprep.subr.bf16.mxu0 0
    %531 = vmatpush1.bf16.msra.mxu0 0
    %532 = vmatprep.subr.bf16.mxu0 0
    %533 = vmatpush1.bf16.msra.mxu0 0
    %534 = vmatprep.subr.bf16.mxu0 0
    %535 = vmatpush1.bf16.msra.mxu0 0
    %536 = vmatprep.subr.bf16.mxu0 0
    %537 = vmatpush1.bf16.msra.mxu0 0
    %538 = vmatprep.subr.bf16.mxu0 0
    %539 = vmatpush1.bf16.msra.mxu0 0
    %540 = vmatprep.subr.bf16.mxu0 0
    %541 = vmatpush1.bf16.msra.mxu0 0
    %542 = vmatprep.mubr.bf16.mxu0 0
    %543 = vmatmul.mubr.bf16.gmra.mrb[0].mxu0 %v508
    %v544 = vpop.f32.mrb[0].mxu0
    %v545 = vadd.f32 0.0, %v544
    %v546 = vpop.f32.mrb[0].mxu0
    %v547 = vpop.f32.mrb[0].mxu0
    %v548 = vadd.f32 0.0, %v547
    %v549 = vpop.f32.mrb[0].mxu0
    %550 = vdwg.mxu0
    %v551 = vadd.f32 %v477, %v545
    %v552 = vadd.f32 %v480, %v548
    %v553 = vld [vmem:[%s4] sm:$0x1]
    %v555 = vlaneseq
    %v556 = vshrl.u32 %v555, 7
    %v557 = vsub.s32 0, %v556
    %v558 = vrot.slane %v553, %v557
    %v560 = vadd.f32 %v551, %v558
    %v561 = vadd.f32 %v552, %v558
    %v562 = vmax.f32 %v560, 0.0
    %v563 = vmax.f32 %v561, 0.0
    %v564 = vld [vmem:[%s5] sm:$0xff]
    %566 = vset.pattern.permute.xlu0 0
    %567 = vperm.xlu0 %566, %v564
    %v568 = vpop.permute.xlu0 %567
    %v570 = vmul.f32 %v562, %v568
    %v571 = vmul.f32 %v563, %v568
    %v572 = vsel %vm159, %v570, 0.0
    %v573 = vrot.slane %v572, 4
    %v574 = vadd.f32 %v572, %v573
    %v575 = vrot.slane %v574, 2
    %v576 = vadd.f32 %v574, %v575
    %v577 = vrot.slane %v576, 1
    %v578 = vadd.f32 %v576, %v577
    %v579 = vsel %vm159, %v571, 0.0
    %v580 = vrot.slane %v579, 4
    %v581 = vadd.f32 %v579, %v580
    %v582 = vrot.slane %v581, 2
    %v583 = vadd.f32 %v581, %v582
    %v584 = vrot.slane %v583, 1
    %v585 = vadd.f32 %v583, %v584
    %s586 = sld [smem:[#allocation2]]
    %v587 = vstv %s586
    %v588 = vadd.f32 %v578, %v587
    %v589 = vadd.f32 %v585, %v587
    %v590 = vmax.f32 %v588, 0.0
    %v591 = vmax.f32 %v589, 0.0
    %v592 = vpack.c.bf16 %v590, %v590
    %v593 = vpack.c.bf16 %v591, %v591
    %v594 = vld [vmem:[%s7] sm:$0xf]
    %v595 = vld [vmem:[%s7 + $0x4] sm:$0xf]
    %v596 = vld [vmem:[%s7 + $0x8] sm:$0xf]
    %v597 = vld [vmem:[%s7 + $0xc] sm:$0xf]
    %v598 = vld [vmem:[%s8] sm:$0x1]
    %v600 = vlaneseq
    %v601 = vshrl.u32 %v600, 7
    %v602 = vsub.s32 0, %v601
    %v603 = vrot.slane %v598, %v602
    %v607 = vunpack.c.l.b16 %v592
    %v608 = vunpack.c.l.b16 %v593
    %vm609 = vcmask 1041409
    %v610 = vsel %vm609, %v608, %v607
    %v611 = vpack.c.b16 %v610, %v610
    %v616 = vunpack.c.l.b16 %v594
    %v617 = vunpack.c.l.b16 %v595
    %v618 = vunpack.c.l.b16 %v596
    %v619 = vunpack.c.l.b16 %v597
    %v620 = vpack.c.b16 %v617, %v616
    %v621 = vpack.c.b16 %v619, %v618
    %v625 = vsel %vm159, %v611, 0
    %627 = vmatprep.subr.bf16.mxu0 0
    %628 = vmatpush1.bf16.msra.mxu0 %v620
    %629 = vmatprep.subr.bf16.mxu0 0
    %630 = vmatpush1.bf16.msra.mxu0 %v621
    %631 = vmatprep.subr.bf16.mxu0 0
    %632 = vmatpush1.bf16.msra.mxu0 0
    %633 = vmatprep.subr.bf16.mxu0 0
    %634 = vmatpush1.bf16.msra.mxu0 0
    %635 = vmatprep.subr.bf16.mxu0 0
    %636 = vmatpush1.bf16.msra.mxu0 0
    %637 = vmatprep.subr.bf16.mxu0 0
    %638 = vmatpush1.bf16.msra.mxu0 0
    %639 = vmatprep.subr.bf16.mxu0 0
    %640 = vmatpush1.bf16.msra.mxu0 0
    %641 = vmatprep.subr.bf16.mxu0 0
    %642 = vmatpush1.bf16.msra.mxu0 0
    %643 = vmatprep.subr.bf16.mxu0 0
    %644 = vmatpush1.bf16.msra.mxu0 0
    %645 = vmatprep.subr.bf16.mxu0 0
    %646 = vmatpush1.bf16.msra.mxu0 0
    %647 = vmatprep.subr.bf16.mxu0 0
    %648 = vmatpush1.bf16.msra.mxu0 0
    %649 = vmatprep.subr.bf16.mxu0 0
    %650 = vmatpush1.bf16.msra.mxu0 0
    %651 = vmatprep.subr.bf16.mxu0 0
    %652 = vmatpush1.bf16.msra.mxu0 0
    %653 = vmatprep.subr.bf16.mxu0 0
    %654 = vmatpush1.bf16.msra.mxu0 0
    %655 = vmatprep.subr.bf16.mxu0 0
    %656 = vmatpush1.bf16.msra.mxu0 0
    %657 = vmatprep.subr.bf16.mxu0 0
    %658 = vmatpush1.bf16.msra.mxu0 0
    %659 = vmatprep.mubr.bf16.mxu0 0
    %660 = vmatmul.mubr.bf16.gmra.mrb[0].mxu0 %v625
    %v661 = vpop.f32.mrb[0].mxu0
    %v662 = vadd.f32 %v603, %v661
    %v663 = vpop.f32.mrb[0].mxu0
    %v664 = vpop.f32.mrb[0].mxu0
    %v665 = vpop.f32.mrb[0].mxu0
    %666 = vdwg.mxu0
    %v667 = vmax.f32 %v662, 0.0
    %v668 = vpack.c.bf16 %v667, %v667
    %v669 = vld [vmem:[%s9] sm:$0xf]
    %v670 = vld [vmem:[%s9 + $0x4] sm:$0xf]
    %v671 = vld [vmem:[%s9 + $0x8] sm:$0xf]
    %v672 = vld [vmem:[%s9 + $0xc] sm:$0xf]
    %v673 = vld [vmem:[%s10] sm:$0x1]
    %v675 = vlaneseq
    %v676 = vshrl.u32 %v675, 7
    %v677 = vsub.s32 0, %v676
    %v678 = vrot.slane %v673, %v677
    %v684 = vunpack.c.l.b16 %v669
    %v685 = vunpack.c.l.b16 %v670
    %v686 = vunpack.c.l.b16 %v671
    %v687 = vunpack.c.l.b16 %v672
    %v688 = vpack.c.b16 %v685, %v684
    %v689 = vpack.c.b16 %v687, %v686
    %v693 = vsel %vm159, %v668, 0
    %695 = vmatprep.subr.bf16.mxu0 0
    %696 = vmatpush1.bf16.msra.mxu0 %v688
    %697 = vmatprep.subr.bf16.mxu0 0
    %698 = vmatpush1.bf16.msra.mxu0 %v689
    %699 = vmatprep.subr.bf16.mxu0 0
    %700 = vmatpush1.bf16.msra.mxu0 0
    %701 = vmatprep.subr.bf16.mxu0 0
    %702 = vmatpush1.bf16.msra.mxu0 0
    %703 = vmatprep.subr.bf16.mxu0 0
    %704 = vmatpush1.bf16.msra.mxu0 0
    %705 = vmatprep.subr.bf16.mxu0 0
    %706 = vmatpush1.bf16.msra.mxu0 0
    %707 = vmatprep.subr.bf16.mxu0 0
    %708 = vmatpush1.bf16.msra.mxu0 0
    %709 = vmatprep.subr.bf16.mxu0 0
    %710 = vmatpush1.bf16.msra.mxu0 0
    %711 = vmatprep.subr.bf16.mxu0 0
    %712 = vmatpush1.bf16.msra.mxu0 0
    %713 = vmatprep.subr.bf16.mxu0 0
    %714 = vmatpush1.bf16.msra.mxu0 0
    %715 = vmatprep.subr.bf16.mxu0 0
    %716 = vmatpush1.bf16.msra.mxu0 0
    %717 = vmatprep.subr.bf16.mxu0 0
    %718 = vmatpush1.bf16.msra.mxu0 0
    %719 = vmatprep.subr.bf16.mxu0 0
    %720 = vmatpush1.bf16.msra.mxu0 0
    %721 = vmatprep.subr.bf16.mxu0 0
    %722 = vmatpush1.bf16.msra.mxu0 0
    %723 = vmatprep.subr.bf16.mxu0 0
    %724 = vmatpush1.bf16.msra.mxu0 0
    %725 = vmatprep.subr.bf16.mxu0 0
    %726 = vmatpush1.bf16.msra.mxu0 0
    %727 = vmatprep.mubr.bf16.mxu0 0
    %728 = vmatmul.mubr.bf16.gmra.mrb[0].mxu0 %v693
    %v729 = vpop.f32.mrb[0].mxu0
    %v730 = vadd.f32 %v678, %v729
    %v731 = vpop.f32.mrb[0].mxu0
    %v732 = vpop.f32.mrb[0].mxu0
    %v733 = vpop.f32.mrb[0].mxu0
    %734 = vdwg.mxu0
    %vm735 = vcmask 254976
    %736 = vst.msk [vmem:[#allocation9] sm:$0x3] %vm735, %v730
    // Predicated region
    $region58: #{tpu_custom_call.1} parent=1 // pred_check
      _
    $region59: #{tpu_custom_call.1} parent=1 // pred_check_branch
      %738 = sbr.rel (0) target = $region61
    $region60: #{tpu_custom_call.1} parent=1 // pred_region
      %s740 = ssub.s32 32, 32
      %741 = vsyncadd [#allocation5], %s740
      %s743 = sshll.u32 [#allocation9], 4
      %s744 = int_to_ptr.vmem [resolvable:$true] %s743
      %746 = dma.vmem_to_hbm [thread:$0]  %s744, 32, %s11, [#allocation5]
    $region61: #{tpu_custom_call.1} parent=1 // pred_fallthru
      _
    // Predicated region
    $region62: #{tpu_custom_call.1} parent=1 // pred_check
      _
    $region63: #{tpu_custom_call.1} parent=1 // pred_check_branch
      %748 = sbr.rel (0) target = $region65
    $region64: #{tpu_custom_call.1} parent=1 // pred_region
      %749 = dma.done [#allocation5], 32
    $region65: #{tpu_custom_call.1} parent=1 // pred_fallthru
      _
    %750 = vsyncpa [#allocation4], 1
    %751 = vsyncpa [#allocation7], 1
    %752 = vsyncpa [#allocation5], 1

</llo_original>
